<compile_context>
chip_gen: v5e
topology: v5e:2x2
jax: 0.10.0
libtpu: 0.0.40
codegen_flags: <defaults>
</compile_context>

<pallas_src>
import functools

import numpy as np
import jax
import jax.numpy as jnp
from jax.experimental import pallas as pl


N_IPM = 30  # outer interior-point iterations (fixed count, tiny problem)


# ---------------------------------------------------------------------------
# Shared QP-solver math (pure jnp; used both inside the Pallas kernel and as
# a plain-XLA reference for the sanity check in __main__).
# ---------------------------------------------------------------------------
def _ipm_solve(z0, mu, dg, d2g, G, Gt, Gsq, h, *, n_ipm, n_cg):
    """Batched primal-dual interior-point solve of
         min 1/2 z^T diag(q) z + p^T z   s.t.  G z <= h
       with q = d2g + 1, p = dg - d2g*z0 - mu.   Shapes:
         z0/mu/dg/d2g: (B, n),  G/Gsq: (m, n),  Gt: (n, m),  h: (1, m)."""
    f32 = jnp.float32
    q = d2g + 1.0                      # diagonal of Q, (B, n)
    p = dg - d2g * z0 - mu             # linear term,   (B, n)
    B, n = z0.shape
    m = G.shape[0]
    m_f = f32(m)
    sigma = f32(0.1)                   # centering parameter
    big = f32(1e30)
    tiny = f32(1e-30)

    def Gmul(v):                       # (B, n) -> (B, m):  G v
        return jnp.dot(v, Gt, preferred_element_type=jnp.float32)

    def GTmul(u):                      # (B, m) -> (B, n):  G^T u
        return jnp.dot(u, G, preferred_element_type=jnp.float32)

    # infeasible start
    z = -p / q
    s = jnp.maximum(h - Gmul(z), 1.0)          # (B, m), strictly positive
    lam = jnp.ones((B, m), f32)

    def ipm_step(_, carry):
        z, s, lam = carry
        Gz = Gmul(z)
        r_d = q * z + p + GTmul(lam)                                  # (B, n)
        r_p = Gz + s - h                                              # (B, m)
        mu_gap = jnp.sum(lam * s, axis=-1, keepdims=True) / m_f       # (B, 1)
        r_c = lam * s - sigma * mu_gap                                # (B, m)
        W = lam / s                                                   # (B, m)
        rhs = -r_d - GTmul((lam * r_p - r_c) / s)                     # (B, n)

        # Jacobi preconditioner: diag(M) = q + (G*G)^T (lam/s)
        diagM = q + jnp.dot(W, Gsq, preferred_element_type=jnp.float32)
        inv_diag = 1.0 / diagM

        def matvec(d):                 # M d = q*d + G^T (W * (G d)), SPD
            return q * d + GTmul(W * Gmul(d))

        # Jacobi-preconditioned CG for M dz = rhs
        x0 = jnp.zeros_like(rhs)
        r0 = rhs
        zv0 = inv_diag * r0
        d0 = zv0
        rz0 = jnp.sum(r0 * zv0, axis=-1, keepdims=True)

        def cg_step(_, cg):
            x, r, d, rz = cg
            Md = matvec(d)
            dMd = jnp.sum(d * Md, axis=-1, keepdims=True)
            safe_dMd = jnp.where(dMd > tiny, dMd, 1.0)
            alpha = jnp.where(dMd > tiny, rz / safe_dMd, 0.0)
            x = x + alpha * d
            r = r - alpha * Md
            zv = inv_diag * r
            rz_new = jnp.sum(r * zv, axis=-1, keepdims=True)
            safe_rz = jnp.where(rz > tiny, rz, 1.0)
            beta = jnp.where(rz > tiny, rz_new / safe_rz, 0.0)
            d = zv + beta * d
            return x, r, d, rz_new

        dz, _, _, _ = jax.lax.fori_loop(0, n_cg, cg_step, (x0, r0, d0, rz0))

        Gdz = Gmul(dz)
        ds = -r_p - Gdz
        dlam = (lam * (Gdz + r_p) - r_c) / s

        # fraction-to-boundary step length (per batch element)
        safe_ds = jnp.where(ds < 0, ds, -1.0)
        a_s = jnp.min(jnp.where(ds < 0, -s / safe_ds, big),
                      axis=-1, keepdims=True)
        safe_dl = jnp.where(dlam < 0, dlam, -1.0)
        a_l = jnp.min(jnp.where(dlam < 0, -lam / safe_dl, big),
                      axis=-1, keepdims=True)
        alpha = jnp.minimum(1.0, 0.995 * jnp.minimum(a_s, a_l))

        z = z + alpha * dz
        s = jnp.maximum(s + alpha * ds, 1e-12)
        lam = jnp.maximum(lam + alpha * dlam, 1e-12)
        return z, s, lam

    z, s, lam = jax.lax.fori_loop(0, n_ipm, ipm_step, (z, s, lam))
    return z


# ---------------------------------------------------------------------------
# Pallas kernel: entire batched QP solve fused into one launch.
# ---------------------------------------------------------------------------
def qp_kernel(z0_ref, mu_ref, dg_ref, d2g_ref, G_ref, Gt_ref, Gsq_ref, h_ref,
              out_ref, *, n_ipm, n_cg):
    out_ref[...] = _ipm_solve(
        z0_ref[...], mu_ref[...], dg_ref[...], d2g_ref[...],
        G_ref[...], Gt_ref[...], Gsq_ref[...], h_ref[...],
        n_ipm=n_ipm, n_cg=n_cg)


def _full_spec(shape):
    # grid-less call: whole array is one VMEM block
    return pl.BlockSpec(shape, lambda: (0,) * len(shape))


@jax.jit
def _qp_forward(z0, mu, dg, d2g, G, Gt, Gsq, h):
    B, n = z0.shape
    kernel = functools.partial(qp_kernel, n_ipm=N_IPM, n_cg=n)
    return pl.pallas_call(
        kernel,
        out_shape=jax.ShapeDtypeStruct((B, n), jnp.float32),
        in_specs=[_full_spec(z0.shape), _full_spec(mu.shape),
                  _full_spec(dg.shape), _full_spec(d2g.shape),
                  _full_spec(G.shape), _full_spec(Gt.shape),
                  _full_spec(Gsq.shape), _full_spec(h.shape)],
        out_specs=_full_spec((B, n)),
    )(z0, mu, dg, d2g, G, Gt, Gsq, h)


# ---------------------------------------------------------------------------
# Module-equivalent wrapper
# ---------------------------------------------------------------------------
class SolveSchedulingQP:
    """Pallas/TPU equivalent of the PyTorch SolveSchedulingQP module."""

    def __init__(self, params):
        self.c_ramp = float(params["c_ramp"])
        self.n = int(params["n"])
        n = self.n
        D = np.eye(n - 1, n) - np.eye(n - 1, n, 1)          # (n-1, n)
        Gnp = np.vstack([D, -D]).astype(np.float32)          # (2(n-1), n)
        self.G = jnp.asarray(Gnp)                            # (m, n)
        self.Gt = jnp.asarray(np.ascontiguousarray(Gnp.T))   # (n, m) — no in-kernel transpose
        self.Gsq = jnp.asarray(Gnp * Gnp)                    # (m, n) — Jacobi diag helper
        self.h = jnp.full((1, Gnp.shape[0]), self.c_ramp, jnp.float32)   # (1, m)

    def forward(self, z0, mu, dg, d2g):
        z0 = jnp.asarray(z0, jnp.float32)
        mu = jnp.asarray(mu, jnp.float32)
        dg = jnp.asarray(dg, jnp.float32)
        d2g = jnp.asarray(d2g, jnp.float32)
        return _qp_forward(z0, mu, dg, d2g, self.G, self.Gt, self.Gsq, self.h)

    __call__ = forward


# ---------------------------------------------------------------------------
if __name__ == "__main__":
    key = jax.random.PRNGKey(0)
    B, n = 2, 24                       # 24-period scheduling horizon, small batch
    params = {"c_ramp": 0.4, "n": n}
    qp = SolveSchedulingQP(params)

    k1, k2, k3, k4 = jax.random.split(key, 4)
    z0 = jax.random.normal(k1, (B, n), jnp.float32)
    mu = 0.5 * jax.random.normal(k2, (B, n), jnp.float32)
    dg = jax.random.normal(k3, (B, n), jnp.float32)
    d2g = jnp.abs(jax.random.normal(k4, (B, n), jnp.float32)) + 0.1   # convex g => d2g > 0

    z = qp(z0, mu, dg, d2g)
    jax.block_until_ready(z)

    # ---- sanity checks -----------------------------------------------------
    assert z.shape == (B, n)
    assert bool(jnp.all(jnp.isfinite(z)))

    # primal feasibility: G z <= h (small solver tolerance)
    viol = float(jnp.max(jnp.dot(z, qp.Gt) - qp.h))
    assert viol < 1e-3, f"constraint violation {viol}"

    # agreement with the same solver run as plain XLA (no Pallas)
    ref_fn = jax.jit(functools.partial(_ipm_solve, n_ipm=N_IPM, n_cg=n))
    z_ref = ref_fn(z0, mu, dg, d2g, qp.G, qp.Gt, qp.Gsq, qp.h)
    jax.block_until_ready(z_ref)
    max_diff = float(jnp.max(jnp.abs(z - z_ref)))
    assert max_diff < 1e-2, f"kernel vs reference mismatch {max_diff}"

    print("KERNEL_OK")
</pallas_src>

<mosaic_0001>
module attributes {stable_mosaic.version = 11 : i64} {
  func.func @qp_kernel(%arg0: memref<2x24xf32, #tpu.memory_space<vmem>>, %arg1: memref<2x24xf32, #tpu.memory_space<vmem>>, %arg2: memref<2x24xf32, #tpu.memory_space<vmem>>, %arg3: memref<2x24xf32, #tpu.memory_space<vmem>>, %arg4: memref<46x24xf32, #tpu.memory_space<vmem>>, %arg5: memref<24x46xf32, #tpu.memory_space<vmem>>, %arg6: memref<46x24xf32, #tpu.memory_space<vmem>>, %arg7: memref<1x46xf32, #tpu.memory_space<vmem>>, %arg8: memref<2x24xf32, #tpu.memory_space<vmem>>) attributes {dimension_semantics = [], scalar_prefetch = 0 : i64, scratch_operands = 0 : i64, tpu.core_type = #tpu.core_type<tc>} {
    %c0 = arith.constant 0 : index
    %c0_0 = arith.constant 0 : index
    %0 = vector.load %arg0[%c0, %c0_0] : memref<2x24xf32, #tpu.memory_space<vmem>>, vector<2x24xf32>
    %c0_1 = arith.constant 0 : index
    %c0_2 = arith.constant 0 : index
    %1 = vector.load %arg1[%c0_1, %c0_2] : memref<2x24xf32, #tpu.memory_space<vmem>>, vector<2x24xf32>
    %c0_3 = arith.constant 0 : index
    %c0_4 = arith.constant 0 : index
    %2 = vector.load %arg2[%c0_3, %c0_4] : memref<2x24xf32, #tpu.memory_space<vmem>>, vector<2x24xf32>
    %c0_5 = arith.constant 0 : index
    %c0_6 = arith.constant 0 : index
    %3 = vector.load %arg3[%c0_5, %c0_6] : memref<2x24xf32, #tpu.memory_space<vmem>>, vector<2x24xf32>
    %c0_7 = arith.constant 0 : index
    %c0_8 = arith.constant 0 : index
    %4 = vector.load %arg4[%c0_7, %c0_8] : memref<46x24xf32, #tpu.memory_space<vmem>>, vector<46x24xf32>
    %c0_9 = arith.constant 0 : index
    %c0_10 = arith.constant 0 : index
    %5 = vector.load %arg5[%c0_9, %c0_10] : memref<24x46xf32, #tpu.memory_space<vmem>>, vector<24x46xf32>
    %c0_11 = arith.constant 0 : index
    %c0_12 = arith.constant 0 : index
    %6 = vector.load %arg6[%c0_11, %c0_12] : memref<46x24xf32, #tpu.memory_space<vmem>>, vector<46x24xf32>
    %c0_13 = arith.constant 0 : index
    %c0_14 = arith.constant 0 : index
    %7 = vector.load %arg7[%c0_13, %c0_14] : memref<1x46xf32, #tpu.memory_space<vmem>>, vector<1x46xf32>
    %cst = arith.constant 1.000000e+00 : f32
    %8 = vector.broadcast %cst : f32 to vector<2x24xf32>
    %9 = arith.addf %3, %8 : vector<2x24xf32>
    %10 = arith.mulf %3, %0 : vector<2x24xf32>
    %11 = arith.subf %2, %10 : vector<2x24xf32>
    %12 = arith.subf %11, %1 : vector<2x24xf32>
    %cst_15 = arith.constant 0.000000e+00 : f32
    %13 = vector.broadcast %cst_15 : f32 to vector<2x24xf32>
    %14 = arith.subf %13, %12 : vector<2x24xf32>
    %15 = arith.divf %14, %9 : vector<2x24xf32>
    %cst_16 = arith.constant dense<0.000000e+00> : vector<2x46xf32>
    %16 = tpu.matmul %15, %5, %cst_16 {dimension_numbers = #tpu.dot_dimension_numbers<[1], [0], [0], [1], [0, 0, 1, 1], [], []>} : vector<2x24xf32>, vector<24x46xf32>, vector<2x46xf32> -> vector<2x46xf32>
    %17 = vector.broadcast %7 : vector<1x46xf32> to vector<2x46xf32>
    %18 = arith.subf %17, %16 : vector<2x46xf32>
    %cst_17 = arith.constant 1.000000e+00 : f32
    %19 = vector.broadcast %cst_17 : f32 to vector<2x46xf32>
    %20 = arith.maximumf %18, %19 : vector<2x46xf32>
    %cst_18 = arith.constant 1.000000e+00 : f32
    %21 = vector.broadcast %cst_18 : f32 to vector<2x46xf32>
    %cst_19 = arith.constant 4.600000e+01 : f32
    %cst_20 = arith.constant 1.000000e-01 : f32
    %cst_21 = arith.constant 1.000000e-30 : f32
    %cst_22 = arith.constant 1.000000e+30 : f32
    %c0_i32 = arith.constant 0 : i32
    %c30_i32 = arith.constant 30 : i32
    %22 = arith.addi %c0_i32, %c30_i32 : i32
    %c1_i32 = arith.constant 1 : i32
    %23:3 = scf.for %arg9 = %c0_i32 to %22 step %c1_i32 iter_args(%arg10 = %15, %arg11 = %20, %arg12 = %21) -> (vector<2x24xf32>, vector<2x46xf32>, vector<2x46xf32>)  : i32 {
      %cst_25 = arith.constant dense<0.000000e+00> : vector<2x46xf32>
      %25 = tpu.matmul %arg10, %5, %cst_25 {dimension_numbers = #tpu.dot_dimension_numbers<[1], [0], [0], [1], [0, 0, 1, 1], [], []>} : vector<2x24xf32>, vector<24x46xf32>, vector<2x46xf32> -> vector<2x46xf32>
      %26 = arith.mulf %9, %arg10 : vector<2x24xf32>
      %27 = arith.addf %26, %12 : vector<2x24xf32>
      %cst_26 = arith.constant dense<0.000000e+00> : vector<2x24xf32>
      %28 = tpu.matmul %arg12, %4, %cst_26 {dimension_numbers = #tpu.dot_dimension_numbers<[1], [0], [0], [1], [0, 0, 1, 1], [], []>} : vector<2x46xf32>, vector<46x24xf32>, vector<2x24xf32> -> vector<2x24xf32>
      %29 = arith.addf %27, %28 : vector<2x24xf32>
      %30 = arith.addf %25, %arg11 : vector<2x46xf32>
      %31 = vector.broadcast %7 : vector<1x46xf32> to vector<2x46xf32>
      %32 = arith.subf %30, %31 : vector<2x46xf32>
      %33 = arith.mulf %arg12, %arg11 : vector<2x46xf32>
      %cst_27 = arith.constant dense<0.000000e+00> : vector<2xf32>
      %34 = vector.multi_reduction <add>, %33, %cst_27 [1] : vector<2x46xf32> to vector<2xf32>
      %35 = vector.shape_cast %34 : vector<2xf32> to vector<2x1xf32>
      %36 = vector.broadcast %cst_19 : f32 to vector<2x1xf32>
      %37 = arith.divf %35, %36 : vector<2x1xf32>
      %38 = arith.mulf %arg12, %arg11 : vector<2x46xf32>
      %39 = vector.broadcast %cst_20 : f32 to vector<2x1xf32>
      %40 = arith.mulf %39, %37 : vector<2x1xf32>
      %41 = vector.broadcast %40 : vector<2x1xf32> to vector<2x46xf32>
      %42 = arith.subf %38, %41 : vector<2x46xf32>
      %43 = arith.divf %arg12, %arg11 : vector<2x46xf32>
      %cst_28 = arith.constant 0.000000e+00 : f32
      %44 = vector.broadcast %cst_28 : f32 to vector<2x24xf32>
      %45 = arith.subf %44, %29 : vector<2x24xf32>
      %46 = arith.mulf %arg12, %32 : vector<2x46xf32>
      %47 = arith.subf %46, %42 : vector<2x46xf32>
      %48 = arith.divf %47, %arg11 : vector<2x46xf32>
      %cst_29 = arith.constant dense<0.000000e+00> : vector<2x24xf32>
      %49 = tpu.matmul %48, %4, %cst_29 {dimension_numbers = #tpu.dot_dimension_numbers<[1], [0], [0], [1], [0, 0, 1, 1], [], []>} : vector<2x46xf32>, vector<46x24xf32>, vector<2x24xf32> -> vector<2x24xf32>
      %50 = arith.subf %45, %49 : vector<2x24xf32>
      %cst_30 = arith.constant dense<0.000000e+00> : vector<2x24xf32>
      %51 = tpu.matmul %43, %6, %cst_30 {dimension_numbers = #tpu.dot_dimension_numbers<[1], [0], [0], [1], [0, 0, 1, 1], [], []>} : vector<2x46xf32>, vector<46x24xf32>, vector<2x24xf32> -> vector<2x24xf32>
      %52 = arith.addf %9, %51 : vector<2x24xf32>
      %cst_31 = arith.constant 1.000000e+00 : f32
      %53 = vector.broadcast %cst_31 : f32 to vector<2x24xf32>
      %54 = arith.divf %53, %52 : vector<2x24xf32>
      %cst_32 = arith.constant 0.000000e+00 : f32
      %55 = vector.broadcast %cst_32 : f32 to vector<2x24xf32>
      %56 = arith.mulf %54, %50 : vector<2x24xf32>
      %57 = arith.mulf %50, %56 : vector<2x24xf32>
      %cst_33 = arith.constant dense<0.000000e+00> : vector<2xf32>
      %58 = vector.multi_reduction <add>, %57, %cst_33 [1] : vector<2x24xf32> to vector<2xf32>
      %59 = vector.shape_cast %58 : vector<2xf32> to vector<2x1xf32>
      %c0_i32_34 = arith.constant 0 : i32
      %c24_i32 = arith.constant 24 : i32
      %60 = arith.addi %c0_i32_34, %c24_i32 : i32
      %c1_i32_35 = arith.constant 1 : i32
      %61:4 = scf.for %arg13 = %c0_i32_34 to %60 step %c1_i32_35 iter_args(%arg14 = %55, %arg15 = %50, %arg16 = %56, %arg17 = %59) -> (vector<2x24xf32>, vector<2x24xf32>, vector<2x24xf32>, vector<2x1xf32>)  : i32 {
        %114 = arith.mulf %9, %arg16 : vector<2x24xf32>
        %cst_52 = arith.constant dense<0.000000e+00> : vector<2x46xf32>
        %115 = tpu.matmul %arg16, %5, %cst_52 {dimension_numbers = #tpu.dot_dimension_numbers<[1], [0], [0], [1], [0, 0, 1, 1], [], []>} : vector<2x24xf32>, vector<24x46xf32>, vector<2x46xf32> -> vector<2x46xf32>
        %116 = arith.mulf %43, %115 : vector<2x46xf32>
        %cst_53 = arith.constant dense<0.000000e+00> : vector<2x24xf32>
        %117 = tpu.matmul %116, %4, %cst_53 {dimension_numbers = #tpu.dot_dimension_numbers<[1], [0], [0], [1], [0, 0, 1, 1], [], []>} : vector<2x46xf32>, vector<46x24xf32>, vector<2x24xf32> -> vector<2x24xf32>
        %118 = arith.addf %114, %117 : vector<2x24xf32>
        %119 = arith.mulf %arg16, %118 : vector<2x24xf32>
        %cst_54 = arith.constant dense<0.000000e+00> : vector<2xf32>
        %120 = vector.multi_reduction <add>, %119, %cst_54 [1] : vector<2x24xf32> to vector<2xf32>
        %121 = vector.shape_cast %120 : vector<2xf32> to vector<2x1xf32>
        %122 = vector.broadcast %cst_21 : f32 to vector<2x1xf32>
        %123 = arith.cmpf ogt, %121, %122 : vector<2x1xf32>
        %cst_55 = arith.constant 1.000000e+00 : f32
        %124 = vector.broadcast %cst_55 : f32 to vector<2x1xf32>
        %125 = arith.select %123, %121, %124 : vector<2x1xi1>, vector<2x1xf32>
        %126 = vector.broadcast %cst_21 : f32 to vector<2x1xf32>
        %127 = arith.cmpf ogt, %121, %126 : vector<2x1xf32>
        %128 = arith.divf %arg17, %125 : vector<2x1xf32>
        %cst_56 = arith.constant 0.000000e+00 : f32
        %129 = vector.broadcast %cst_56 : f32 to vector<2x1xf32>
        %130 = arith.select %127, %128, %129 : vector<2x1xi1>, vector<2x1xf32>
        %131 = vector.broadcast %130 : vector<2x1xf32> to vector<2x24xf32>
        %132 = arith.mulf %131, %arg16 : vector<2x24xf32>
        %133 = arith.addf %arg14, %132 : vector<2x24xf32>
        %134 = vector.broadcast %130 : vector<2x1xf32> to vector<2x24xf32>
        %135 = arith.mulf %134, %118 : vector<2x24xf32>
        %136 = arith.subf %arg15, %135 : vector<2x24xf32>
        %137 = arith.mulf %54, %136 : vector<2x24xf32>
        %138 = arith.mulf %136, %137 : vector<2x24xf32>
        %cst_57 = arith.constant dense<0.000000e+00> : vector<2xf32>
        %139 = vector.multi_reduction <add>, %138, %cst_57 [1] : vector<2x24xf32> to vector<2xf32>
        %140 = vector.shape_cast %139 : vector<2xf32> to vector<2x1xf32>
        %141 = vector.broadcast %cst_21 : f32 to vector<2x1xf32>
        %142 = arith.cmpf ogt, %arg17, %141 : vector<2x1xf32>
        %cst_58 = arith.constant 1.000000e+00 : f32
        %143 = vector.broadcast %cst_58 : f32 to vector<2x1xf32>
        %144 = arith.select %142, %arg17, %143 : vector<2x1xi1>, vector<2x1xf32>
        %145 = vector.broadcast %cst_21 : f32 to vector<2x1xf32>
        %146 = arith.cmpf ogt, %arg17, %145 : vector<2x1xf32>
        %147 = arith.divf %140, %144 : vector<2x1xf32>
        %cst_59 = arith.constant 0.000000e+00 : f32
        %148 = vector.broadcast %cst_59 : f32 to vector<2x1xf32>
        %149 = arith.select %146, %147, %148 : vector<2x1xi1>, vector<2x1xf32>
        %150 = vector.broadcast %149 : vector<2x1xf32> to vector<2x24xf32>
        %151 = arith.mulf %150, %arg16 : vector<2x24xf32>
        %152 = arith.addf %137, %151 : vector<2x24xf32>
        scf.yield %133, %136, %152, %140 : vector<2x24xf32>, vector<2x24xf32>, vector<2x24xf32>, vector<2x1xf32>
      }
      %cst_36 = arith.constant dense<0.000000e+00> : vector<2x46xf32>
      %62 = tpu.matmul %61#0, %5, %cst_36 {dimension_numbers = #tpu.dot_dimension_numbers<[1], [0], [0], [1], [0, 0, 1, 1], [], []>} : vector<2x24xf32>, vector<24x46xf32>, vector<2x46xf32> -> vector<2x46xf32>
      %cst_37 = arith.constant 0.000000e+00 : f32
      %63 = vector.broadcast %cst_37 : f32 to vector<2x46xf32>
      %64 = arith.subf %63, %32 : vector<2x46xf32>
      %65 = arith.subf %64, %62 : vector<2x46xf32>
      %66 = arith.addf %62, %32 : vector<2x46xf32>
      %67 = arith.mulf %arg12, %66 : vector<2x46xf32>
      %68 = arith.subf %67, %42 : vector<2x46xf32>
      %69 = arith.divf %68, %arg11 : vector<2x46xf32>
      %cst_38 = arith.constant 0.000000e+00 : f32
      %70 = vector.broadcast %cst_38 : f32 to vector<2x46xf32>
      %71 = arith.cmpf olt, %65, %70 : vector<2x46xf32>
      %cst_39 = arith.constant -1.000000e+00 : f32
      %72 = vector.broadcast %cst_39 : f32 to vector<2x46xf32>
      %73 = arith.select %71, %65, %72 : vector<2x46xi1>, vector<2x46xf32>
      %cst_40 = arith.constant 0.000000e+00 : f32
      %74 = vector.broadcast %cst_40 : f32 to vector<2x46xf32>
      %75 = arith.cmpf olt, %65, %74 : vector<2x46xf32>
      %cst_41 = arith.constant 0.000000e+00 : f32
      %76 = vector.broadcast %cst_41 : f32 to vector<2x46xf32>
      %77 = arith.subf %76, %arg11 : vector<2x46xf32>
      %78 = arith.divf %77, %73 : vector<2x46xf32>
      %79 = vector.broadcast %cst_22 : f32 to vector<2x46xf32>
      %80 = arith.select %75, %78, %79 : vector<2x46xi1>, vector<2x46xf32>
      %cst_42 = arith.constant dense<0x7F800000> : vector<2xf32>
      %81 = vector.multi_reduction <minimumf>, %80, %cst_42 [1] : vector<2x46xf32> to vector<2xf32>
      %82 = vector.shape_cast %81 : vector<2xf32> to vector<2x1xf32>
      %cst_43 = arith.constant 0.000000e+00 : f32
      %83 = vector.broadcast %cst_43 : f32 to vector<2x46xf32>
      %84 = arith.cmpf olt, %69, %83 : vector<2x46xf32>
      %cst_44 = arith.constant -1.000000e+00 : f32
      %85 = vector.broadcast %cst_44 : f32 to vector<2x46xf32>
      %86 = arith.select %84, %69, %85 : vector<2x46xi1>, vector<2x46xf32>
      %cst_45 = arith.constant 0.000000e+00 : f32
      %87 = vector.broadcast %cst_45 : f32 to vector<2x46xf32>
      %88 = arith.cmpf olt, %69, %87 : vector<2x46xf32>
      %cst_46 = arith.constant 0.000000e+00 : f32
      %89 = vector.broadcast %cst_46 : f32 to vector<2x46xf32>
      %90 = arith.subf %89, %arg12 : vector<2x46xf32>
      %91 = arith.divf %90, %86 : vector<2x46xf32>
      %92 = vector.broadcast %cst_22 : f32 to vector<2x46xf32>
      %93 = arith.select %88, %91, %92 : vector<2x46xi1>, vector<2x46xf32>
      %cst_47 = arith.constant dense<0x7F800000> : vector<2xf32>
      %94 = vector.multi_reduction <minimumf>, %93, %cst_47 [1] : vector<2x46xf32> to vector<2xf32>
      %95 = vector.shape_cast %94 : vector<2xf32> to vector<2x1xf32>
      %96 = arith.minimumf %82, %95 : vector<2x1xf32>
      %cst_48 = arith.constant 9.950000e-01 : f32
      %97 = vector.broadcast %cst_48 : f32 to vector<2x1xf32>
      %98 = arith.mulf %97, %96 : vector<2x1xf32>
      %cst_49 = arith.constant 1.000000e+00 : f32
      %99 = vector.broadcast %cst_49 : f32 to vector<2x1xf32>
      %100 = arith.minimumf %99, %98 : vector<2x1xf32>
      %101 = vector.broadcast %100 : vector<2x1xf32> to vector<2x24xf32>
      %102 = arith.mulf %101, %61#0 : vector<2x24xf32>
      %103 = arith.addf %arg10, %102 : vector<2x24xf32>
      %104 = vector.broadcast %100 : vector<2x1xf32> to vector<2x46xf32>
      %105 = arith.mulf %104, %65 : vector<2x46xf32>
      %106 = arith.addf %arg11, %105 : vector<2x46xf32>
      %cst_50 = arith.constant 9.99999996E-13 : f32
      %107 = vector.broadcast %cst_50 : f32 to vector<2x46xf32>
      %108 = arith.maximumf %106, %107 : vector<2x46xf32>
      %109 = vector.broadcast %100 : vector<2x1xf32> to vector<2x46xf32>
      %110 = arith.mulf %109, %69 : vector<2x46xf32>
      %111 = arith.addf %arg12, %110 : vector<2x46xf32>
      %cst_51 = arith.constant 9.99999996E-13 : f32
      %112 = vector.broadcast %cst_51 : f32 to vector<2x46xf32>
      %113 = arith.maximumf %111, %112 : vector<2x46xf32>
      scf.yield %103, %108, %113 : vector<2x24xf32>, vector<2x46xf32>, vector<2x46xf32>
    }
    %c0_23 = arith.constant 0 : index
    %c0_24 = arith.constant 0 : index
    %24 = vector.load %arg8[%c0_23, %c0_24] : memref<2x24xf32, #tpu.memory_space<vmem>>, vector<2x24xf32>
    tpu.vector_store %arg8[%c0_23, %c0_24], %23#0 {strides = array<i32>} : memref<2x24xf32, #tpu.memory_space<vmem>>, vector<2x24xf32>,
    return
  }
}

</mosaic_0001>

<llo_original>
// kernel: _qp_forward.1
$region0: #{_qp_forward.1}
  #allocation0 [shape = 'u32[]', space=smem, size = 0x4, offset = 0x4, fixed_abs, tag = 'smem constant byte address 0x4 - core index']
  #allocation1 [shape = 'u32[72,128]{1,0:T(1,128)}', space=vmem, size = 0x9000, scoped, tag = 'internal scratch']
  %s0 = inlined_call_operand.vmem [shape: f32[2,24], index: 0, kind: input, shape index: {}]
  %s1 = inlined_call_operand.vmem [shape: f32[2,24], index: 1, kind: input, shape index: {}]
  %s2 = inlined_call_operand.vmem [shape: f32[2,24], index: 2, kind: input, shape index: {}]
  %s3 = inlined_call_operand.vmem [shape: f32[2,24], index: 3, kind: input, shape index: {}]
  %s4 = inlined_call_operand.vmem [shape: f32[46,24], index: 4, kind: input, shape index: {}]
  %s5 = inlined_call_operand.vmem [shape: f32[24,46], index: 5, kind: input, shape index: {}]
  %s6 = inlined_call_operand.vmem [shape: f32[46,24], index: 6, kind: input, shape index: {}]
  %s7 = inlined_call_operand.vmem [shape: f32[1,46], index: 7, kind: input, shape index: {}]
  %s8 = inlined_call_operand.hbm [shape: f32[2,24], index: 8, kind: output, shape index: {}]
  %s9 = sld [smem:[#allocation0]]
  $region56: #{_qp_forward.1} parent=0
    _
  %s11 = ssub.s32 1, %s9
  %s12 = scalar_select 0, %s11, %s9
  $region1: #{_qp_forward.1} parent=0
    #allocation2 [shape = 'u8[1024]{0}', space=vmem, size = 0x400, scoped, tag = 'output window, operand 0, single buffered']
    #allocation3 [shape = 's32[1]{0}', space=sflag, size = 0x4, scoped, tag = 'scoped memory for _qp_forward.1']
    %13 = vsyncpa [#allocation3], 0
    // Predicated region
    $region2: #{_qp_forward.1} parent=1 // pred_check
      _
    $region3: #{_qp_forward.1} parent=1 // pred_check_branch
      %15 = sbr.rel (0) target = $region5
    $region4: #{_qp_forward.1} parent=1 // pred_region
      _
    $region5: #{_qp_forward.1} parent=1 // pred_fallthru
      _
    // Predicated region
    $region6: #{_qp_forward.1} parent=1 // pred_check
      _
    $region7: #{_qp_forward.1} parent=1 // pred_check_branch
      %17 = sbr.rel (0) target = $region9
    $region8: #{_qp_forward.1} parent=1 // pred_region
      _
    $region9: #{_qp_forward.1} parent=1 // pred_fallthru
      _
    // Predicated region
    $region10: #{_qp_forward.1} parent=1 // pred_check
      _
    $region11: #{_qp_forward.1} parent=1 // pred_check_branch
      %19 = sbr.rel (0) target = $region13
    $region12: #{_qp_forward.1} parent=1 // pred_region
      _
    $region13: #{_qp_forward.1} parent=1 // pred_fallthru
      _
    // Predicated region
    $region14: #{_qp_forward.1} parent=1 // pred_check
      _
    $region15: #{_qp_forward.1} parent=1 // pred_check_branch
      %21 = sbr.rel (0) target = $region17
    $region16: #{_qp_forward.1} parent=1 // pred_region
      _
    $region17: #{_qp_forward.1} parent=1 // pred_fallthru
      _
    // Predicated region
    $region18: #{_qp_forward.1} parent=1 // pred_check
      _
    $region19: #{_qp_forward.1} parent=1 // pred_check_branch
      %23 = sbr.rel (0) target = $region21
    $region20: #{_qp_forward.1} parent=1 // pred_region
      _
    $region21: #{_qp_forward.1} parent=1 // pred_fallthru
      _
    // Predicated region
    $region22: #{_qp_forward.1} parent=1 // pred_check
      _
    $region23: #{_qp_forward.1} parent=1 // pred_check_branch
      %25 = sbr.rel (0) target = $region25
    $region24: #{_qp_forward.1} parent=1 // pred_region
      _
    $region25: #{_qp_forward.1} parent=1 // pred_fallthru
      _
    // Predicated region
    $region26: #{_qp_forward.1} parent=1 // pred_check
      _
    $region27: #{_qp_forward.1} parent=1 // pred_check_branch
      %27 = sbr.rel (0) target = $region29
    $region28: #{_qp_forward.1} parent=1 // pred_region
      _
    $region29: #{_qp_forward.1} parent=1 // pred_fallthru
      _
    // Predicated region
    $region30: #{_qp_forward.1} parent=1 // pred_check
      _
    $region31: #{_qp_forward.1} parent=1 // pred_check_branch
      %29 = sbr.rel (0) target = $region33
    $region32: #{_qp_forward.1} parent=1 // pred_region
      _
    $region33: #{_qp_forward.1} parent=1 // pred_fallthru
      _
    %v30 = vld [vmem:[%s0] sm:$0x3]
    %v31 = vld [vmem:[%s1] sm:$0x3]
    %v32 = vld [vmem:[%s2] sm:$0x3]
    %v33 = vld [vmem:[%s3] sm:$0x3]
    %v34 = vld [vmem:[%s4] sm:$0xff]
    %v35 = vld [vmem:[%s4 + $0x8] sm:$0xff]
    %v36 = vld [vmem:[%s4 + $0x10] sm:$0xff]
    %v37 = vld [vmem:[%s4 + $0x18] sm:$0xff]
    %v38 = vld [vmem:[%s4 + $0x20] sm:$0xff]
    %v39 = vld [vmem:[%s4 + $0x28] sm:$0x3f]
    %v40 = vld [vmem:[%s5] sm:$0xff]
    %v41 = vld [vmem:[%s5 + $0x8] sm:$0xff]
    %v42 = vld [vmem:[%s5 + $0x10] sm:$0xff]
    %v43 = vld [vmem:[%s6] sm:$0xff]
    %v44 = vld [vmem:[%s6 + $0x8] sm:$0xff]
    %v45 = vld [vmem:[%s6 + $0x10] sm:$0xff]
    %v46 = vld [vmem:[%s6 + $0x18] sm:$0xff]
    %v47 = vld [vmem:[%s6 + $0x20] sm:$0xff]
    %v48 = vld [vmem:[%s6 + $0x28] sm:$0x3f]
    %v49 = vld [vmem:[%s7] sm:$0x1]
    %v50 = vadd.f32 %v33, 1.0
    %v51 = vmul.f32 %v33, %v30
    %v52 = vsub.f32 %v32, %v51
    %v53 = vsub.f32 %v52, %v31
    %v54 = vsub.f32 0.0, %v53
    %v55 = vrcp.pop %v50
    %v56 = vmul.f32 %v50, %v55
    %v57 = vsub.f32 1.0, %v56
    %v58 = vmul.f32 %v55, %v57
    %v59 = vadd.f32 %v55, %v58
    %vm60 = vweird.f32 %v50
    %vm61 = vweird.f32 %v55
    %vm62 = vmor %vm60, %vm61
    %v63 = vsel %vm62, %v55, %v59
    %v64 = vand.u32 2147483647, %v50
    %vm65 = vcmp.eq.f32.partialorder %v64, 8.507059e+37
    %v66 = vand.u32 %v50, 2147483648
    %v67 = vor.u32 1.1754944e-38, %v66
    %v68 = vsel %vm65, %v67, %v63
    %v69 = vmul.f32 %v54, %v68
    %vm70 = vcmask 195584
    %v72 = vsel %vm70, %v69, 0
    %74 = vmatpush.msra.mxu0 0.0
    %75 = vmatpush.msra.mxu0 0.0
    %76 = vmatpush.msra.mxu0 0.0
    %77 = vmatpush.msra.mxu0 0.0
    %78 = vmatpush.msra.mxu0 0.0
    %79 = vmatpush.msra.mxu0 0.0
    %80 = vmatpush.msra.mxu0 0.0
    %81 = vmatpush.msra.mxu0 0.0
    %82 = vmatpush.msra.mxu0 0.0
    %83 = vmatpush.msra.mxu0 0.0
    %84 = vmatpush.msra.mxu0 0.0
    %85 = vmatpush.msra.mxu0 0.0
    %86 = vmatpush.msra.mxu0 0.0
    %87 = vmatpush.msra.mxu0 %v42
    %88 = vmatpush.msra.mxu0 %v41
    %89 = vmatpush.msra.mxu0 %v40
    %90 = vmatmul.f32.gmra.mxu0 %v72
    %v91 = vpop.f32.mrf.mxu0
    %v92 = vadd.f32 0.0, %v91
    %93 = vdwg.mxu0
    %v95 = vperm.slane %v49, 0
    %v97 = vsub.f32 %v95, %v92
    %v98 = vmax.f32 %v97, 1.0
    loop: start=0, step=1, limit=30
    $region34: #{_qp_forward.1} parent=1 // loop_pre_header
      _
    $region35: #{_qp_forward.1} parent=1 // loop_header
      %s100 = sphi 0, %s104
      %p101 = scmp.ge.s32.totalorder %s100, 30
      %v105 = vphi %v69, %v456
      %v106 = vphi %v98, %v459
      %v107 = vphi 1.0, %v462
    $region36: #{_qp_forward.1} parent=1 // loop_header_branch
      %103 = sbr.rel (%p101) target = $region40
    $region37: #{_qp_forward.1} parent=1 // loop_body
      %v108 = vmul.f32 %v50, %v105
      %v109 = vadd.f32 %v108, %v53
      %vm110 = vcmask 375808
      %v112 = vsel %vm110, %v107, 0
      %vm114 = vcmask 1045504
      %v116 = vsel %vm114, %v39, 0
      %118 = vmatpush.msra.mxu0 0.0
      %119 = vmatpush.msra.mxu0 0.0
      %120 = vmatpush.msra.mxu0 0.0
      %121 = vmatpush.msra.mxu0 0.0
      %122 = vmatpush.msra.mxu0 0.0
      %123 = vmatpush.msra.mxu0 0.0
      %124 = vmatpush.msra.mxu0 0.0
      %125 = vmatpush.msra.mxu0 0.0
      %126 = vmatpush.msra.mxu0 0.0
      %127 = vmatpush.msra.mxu0 0.0
      %128 = vmatpush.msra.mxu0 %v116
      %129 = vmatpush.msra.mxu0 %v38
      %130 = vmatpush.msra.mxu0 %v37
      %131 = vmatpush.msra.mxu0 %v36
      %132 = vmatpush.msra.mxu0 %v35
      %133 = vmatpush.msra.mxu0 %v34
      %134 = vmatmul.f32.gmra.mxu0 %v112
      %v135 = vpop.f32.mrf.mxu0
      %v136 = vadd.f32 0.0, %v135
      %137 = vdwg.mxu0
      %v138 = vadd.f32 %v109, %v136
      %v140 = vsel %vm70, %v105, 0
      %142 = vmatpush.msra.mxu0 0.0
      %143 = vmatpush.msra.mxu0 0.0
      %144 = vmatpush.msra.mxu0 0.0
      %145 = vmatpush.msra.mxu0 0.0
      %146 = vmatpush.msra.mxu0 0.0
      %147 = vmatpush.msra.mxu0 0.0
      %148 = vmatpush.msra.mxu0 0.0
      %149 = vmatpush.msra.mxu0 0.0
      %150 = vmatpush.msra.mxu0 0.0
      %151 = vmatpush.msra.mxu0 0.0
      %152 = vmatpush.msra.mxu0 0.0
      %153 = vmatpush.msra.mxu0 0.0
      %154 = vmatpush.msra.mxu0 0.0
      %155 = vmatpush.msra.mxu0 %v42
      %156 = vmatpush.msra.mxu0 %v41
      %157 = vmatpush.msra.mxu0 %v40
      %158 = vmatmul.f32.gmra.mxu0 %v140
      %v159 = vpop.f32.mrf.mxu0
      %v160 = vadd.f32 %v106, %v159
      %161 = vdwg.mxu0
      %v162 = vsub.f32 %v160, %v95
      %v163 = vmul.f32 %v107, %v106
      %vm164 = vcmask 369664
      %v165 = vsel %vm164, %v163, 0.0
      %166 = vadd.xlane.f32.xlu0 %v165
      %v167 = vpop.xlane.xlu0 %166
      %v168 = vrcp.pop 46.0
      %v169 = vmul.f32 46.0, %v168
      %v170 = vsub.f32 1.0, %v169
      %v171 = vmul.f32 %v168, %v170
      %v172 = vadd.f32 %v168, %v171
      %vm173 = vweird.f32 %v168
      %v174 = vsel %vm173, %v168, %v172
      %v175 = vmul.f32 %v167, %v174
      %v176 = vmul.f32 %v175, 0.1
      %v177 = vsub.f32 %v163, %v176
      %v178 = vrcp.pop %v106
      %v179 = vmul.f32 %v106, %v178
      %v180 = vsub.f32 1.0, %v179
      %v181 = vmul.f32 %v178, %v180
      %v182 = vadd.f32 %v178, %v181
      %vm183 = vweird.f32 %v106
      %vm184 = vweird.f32 %v178
      %vm185 = vmor %vm183, %vm184
      %v186 = vsel %vm185, %v178, %v182
      %v187 = vand.u32 2147483647, %v106
      %vm188 = vcmp.eq.f32.partialorder %v187, 8.507059e+37
      %v189 = vand.u32 %v106, 2147483648
      %v190 = vor.u32 1.1754944e-38, %v189
      %v191 = vsel %vm188, %v190, %v186
      %v192 = vmul.f32 %v107, %v191
      %v193 = vsub.f32 0.0, %v138
      %v194 = vmul.f32 %v107, %v162
      %v195 = vsub.f32 %v194, %v177
      %v196 = vmul.f32 %v195, %v191
      %v198 = vsel %vm110, %v196, 0
      %200 = vmatpush.msra.mxu0 0.0
      %201 = vmatpush.msra.mxu0 0.0
      %202 = vmatpush.msra.mxu0 0.0
      %203 = vmatpush.msra.mxu0 0.0
      %204 = vmatpush.msra.mxu0 0.0
      %205 = vmatpush.msra.mxu0 0.0
      %206 = vmatpush.msra.mxu0 0.0
      %207 = vmatpush.msra.mxu0 0.0
      %208 = vmatpush.msra.mxu0 0.0
      %209 = vmatpush.msra.mxu0 0.0
      %210 = vmatpush.msra.mxu0 %v116
      %211 = vmatpush.msra.mxu0 %v38
      %212 = vmatpush.msra.mxu0 %v37
      %213 = vmatpush.msra.mxu0 %v36
      %214 = vmatpush.msra.mxu0 %v35
      %215 = vmatpush.msra.mxu0 %v34
      %216 = vmatmul.f32.gmra.mxu0 %v198
      %v217 = vpop.f32.mrf.mxu0
      %v218 = vadd.f32 0.0, %v217
      %219 = vdwg.mxu0
      %v220 = vsub.f32 %v193, %v218
      %v222 = vsel %vm110, %v192, 0
      %v225 = vsel %vm114, %v48, 0
      %227 = vmatpush.msra.mxu0 0.0
      %228 = vmatpush.msra.mxu0 0.0
      %229 = vmatpush.msra.mxu0 0.0
      %230 = vmatpush.msra.mxu0 0.0
      %231 = vmatpush.msra.mxu0 0.0
      %232 = vmatpush.msra.mxu0 0.0
      %233 = vmatpush.msra.mxu0 0.0
      %234 = vmatpush.msra.mxu0 0.0
      %235 = vmatpush.msra.mxu0 0.0
      %236 = vmatpush.msra.mxu0 0.0
      %237 = vmatpush.msra.mxu0 %v225
      %238 = vmatpush.msra.mxu0 %v47
      %239 = vmatpush.msra.mxu0 %v46
      %240 = vmatpush.msra.mxu0 %v45
      %241 = vmatpush.msra.mxu0 %v44
      %242 = vmatpush.msra.mxu0 %v43
      %243 = vmatmul.f32.gmra.mxu0 %v222
      %v244 = vpop.f32.mrf.mxu0
      %v245 = vadd.f32 0.0, %v244
      %246 = vdwg.mxu0
      %v247 = vadd.f32 %v50, %v245
      %v248 = vrcp.pop %v247
      %v249 = vmul.f32 %v247, %v248
      %v250 = vsub.f32 1.0, %v249
      %v251 = vmul.f32 %v248, %v250
      %v252 = vadd.f32 %v248, %v251
      %vm253 = vweird.f32 %v247
      %vm254 = vweird.f32 %v248
      %vm255 = vmor %vm253, %vm254
      %v256 = vsel %vm255, %v248, %v252
      %v257 = vand.u32 2147483647, %v247
      %vm258 = vcmp.eq.f32.partialorder %v257, 8.507059e+37
      %v259 = vand.u32 %v247, 2147483648
      %v260 = vor.u32 1.1754944e-38, %v259
      %v261 = vsel %vm258, %v260, %v256
      %v262 = vmul.f32 1.0, %v261
      %v263 = vmul.f32 %v262, %v220
      %v264 = vmul.f32 %v220, %v263
      %vm265 = vcmask 189440
      %v266 = vsel %vm265, %v264, 0.0
      %267 = vadd.xlane.f32.xlu0 %v266
      %v268 = vpop.xlane.xlu0 %267
      loop: start=0, step=1, limit=24
      $region41: #{_qp_forward.1} parent=37 // loop_pre_header
        _
      $region42: #{_qp_forward.1} parent=37 // loop_header
        %s270 = sphi 0, %s274
        %p271 = scmp.ge.s32.totalorder %s270, 24
        %v275 = vphi 0.0, %v351
        %v276 = vphi %v220, %v353
        %v277 = vphi %v263, %v378
        %v278 = vphi %v268, %v358
      $region43: #{_qp_forward.1} parent=37 // loop_header_branch
        %273 = sbr.rel (%p271) target = $region47
      $region44: #{_qp_forward.1} parent=37 // loop_body
        %v279 = vmul.f32 %v50, %v277
        %v281 = vsel %vm70, %v277, 0
        %283 = vmatpush.msra.mxu0 0.0
        %284 = vmatpush.msra.mxu0 0.0
        %285 = vmatpush.msra.mxu0 0.0
        %286 = vmatpush.msra.mxu0 0.0
        %287 = vmatpush.msra.mxu0 0.0
        %288 = vmatpush.msra.mxu0 0.0
        %289 = vmatpush.msra.mxu0 0.0
        %290 = vmatpush.msra.mxu0 0.0
        %291 = vmatpush.msra.mxu0 0.0
        %292 = vmatpush.msra.mxu0 0.0
        %293 = vmatpush.msra.mxu0 0.0
        %294 = vmatpush.msra.mxu0 0.0
        %295 = vmatpush.msra.mxu0 0.0
        %296 = vmatpush.msra.mxu0 %v42
        %297 = vmatpush.msra.mxu0 %v41
        %298 = vmatpush.msra.mxu0 %v40
        %299 = vmatmul.f32.gmra.mxu0 %v281
        %v300 = vpop.f32.mrf.mxu0
        %v301 = vadd.f32 0.0, %v300
        %302 = vdwg.mxu0
        %v303 = vmul.f32 %v192, %v301
        %v305 = vsel %vm110, %v303, 0
        %307 = vmatpush.msra.mxu0 0.0
        %308 = vmatpush.msra.mxu0 0.0
        %309 = vmatpush.msra.mxu0 0.0
        %310 = vmatpush.msra.mxu0 0.0
        %311 = vmatpush.msra.mxu0 0.0
        %312 = vmatpush.msra.mxu0 0.0
        %313 = vmatpush.msra.mxu0 0.0
        %314 = vmatpush.msra.mxu0 0.0
        %315 = vmatpush.msra.mxu0 0.0
        %316 = vmatpush.msra.mxu0 0.0
        %317 = vmatpush.msra.mxu0 %v116
        %318 = vmatpush.msra.mxu0 %v38
        %319 = vmatpush.msra.mxu0 %v37
        %320 = vmatpush.msra.mxu0 %v36
        %321 = vmatpush.msra.mxu0 %v35
        %322 = vmatpush.msra.mxu0 %v34
        %323 = vmatmul.f32.gmra.mxu0 %v305
        %v324 = vpop.f32.mrf.mxu0
        %v325 = vadd.f32 0.0, %v324
        %326 = vdwg.mxu0
        %v327 = vadd.f32 %v279, %v325
        %v328 = vmul.f32 %v277, %v327
        %v329 = vsel %vm265, %v328, 0.0
        %330 = vadd.xlane.f32.xlu0 %v329
        %v331 = vpop.xlane.xlu0 %330
        %vm332 = vcmp.gt.f32.partialorder %v331, 1e-30
        %v333 = vsel %vm332, %v331, 1.0
        %v334 = vrcp.pop %v333
        %v335 = vmul.f32 %v333, %v334
        %v336 = vsub.f32 1.0, %v335
        %v337 = vmul.f32 %v334, %v336
        %v338 = vadd.f32 %v334, %v337
        %vm339 = vweird.f32 %v333
        %vm340 = vweird.f32 %v334
        %vm341 = vmor %vm339, %vm340
        %v342 = vsel %vm341, %v334, %v338
        %v343 = vand.u32 2147483647, %v333
        %vm344 = vcmp.eq.f32.partialorder %v343, 8.507059e+37
        %v345 = vand.u32 %v333, 2147483648
        %v346 = vor.u32 1.1754944e-38, %v345
        %v347 = vsel %vm344, %v346, %v342
        %v348 = vmul.f32 %v278, %v347
        %v349 = vsel %vm332, %v348, 0.0
        %v350 = vmul.f32 %v349, %v277
        %v351 = vadd.f32 %v275, %v350
        %v352 = vmul.f32 %v349, %v327
        %v353 = vsub.f32 %v276, %v352
        %v354 = vmul.f32 %v262, %v353
        %v355 = vmul.f32 %v353, %v354
        %v356 = vsel %vm265, %v355, 0.0
        %357 = vadd.xlane.f32.xlu0 %v356
        %v358 = vpop.xlane.xlu0 %357
        %vm359 = vcmp.gt.f32.partialorder %v278, 1e-30
        %v360 = vsel %vm359, %v278, 1.0
        %v361 = vrcp.pop %v360
        %v362 = vmul.f32 %v360, %v361
        %v363 = vsub.f32 1.0, %v362
        %v364 = vmul.f32 %v361, %v363
        %v365 = vadd.f32 %v361, %v364
        %vm366 = vweird.f32 %v360
        %vm367 = vweird.f32 %v361
        %vm368 = vmor %vm366, %vm367
        %v369 = vsel %vm368, %v361, %v365
        %v370 = vand.u32 2147483647, %v360
        %vm371 = vcmp.eq.f32.partialorder %v370, 8.507059e+37
        %v372 = vand.u32 %v360, 2147483648
        %v373 = vor.u32 1.1754944e-38, %v372
        %v374 = vsel %vm371, %v373, %v369
        %v375 = vmul.f32 %v358, %v374
        %v376 = vsel %vm359, %v375, 0.0
        %v377 = vmul.f32 %v376, %v277
        %v378 = vadd.f32 %v354, %v377
      $region45: #{_qp_forward.1} parent=37 // loop_footer
        %s274 = sadd.s32 1, %s270
      $region46: #{_qp_forward.1} parent=37 // loop_footer_branch
        %269 = sbr.rel target = $region42
      $region47: #{_qp_forward.1} parent=37 // loop_exit
        _
      %v380 = vsel %vm70, %v275, 0
      %382 = vmatpush.msra.mxu0 0.0
      %383 = vmatpush.msra.mxu0 0.0
      %384 = vmatpush.msra.mxu0 0.0
      %385 = vmatpush.msra.mxu0 0.0
      %386 = vmatpush.msra.mxu0 0.0
      %387 = vmatpush.msra.mxu0 0.0
      %388 = vmatpush.msra.mxu0 0.0
      %389 = vmatpush.msra.mxu0 0.0
      %390 = vmatpush.msra.mxu0 0.0
      %391 = vmatpush.msra.mxu0 0.0
      %392 = vmatpush.msra.mxu0 0.0
      %393 = vmatpush.msra.mxu0 0.0
      %394 = vmatpush.msra.mxu0 0.0
      %395 = vmatpush.msra.mxu0 %v42
      %396 = vmatpush.msra.mxu0 %v41
      %397 = vmatpush.msra.mxu0 %v40
      %398 = vmatmul.f32.gmra.mxu0 %v380
      %v399 = vpop.f32.mrf.mxu0
      %v400 = vadd.f32 0.0, %v399
      %401 = vdwg.mxu0
      %v402 = vsub.f32 0.0, %v162
      %v403 = vsub.f32 %v402, %v400
      %v404 = vadd.f32 %v400, %v162
      %v405 = vmul.f32 %v107, %v404
      %v406 = vsub.f32 %v405, %v177
      %v407 = vmul.f32 %v406, %v191
      %vm408 = vcmp.lt.f32.partialorder %v403, 0.0
      %v409 = vsel %vm408, %v403, -1.0
      %v410 = vsub.f32 0.0, %v106
      %v411 = vrcp.pop %v409
      %v412 = vmul.f32 %v409, %v411
      %v413 = vsub.f32 1.0, %v412
      %v414 = vmul.f32 %v411, %v413
      %v415 = vadd.f32 %v411, %v414
      %vm416 = vweird.f32 %v409
      %vm417 = vweird.f32 %v411
      %vm418 = vmor %vm416, %vm417
      %v419 = vsel %vm418, %v411, %v415
      %v420 = vand.u32 2147483647, %v409
      %vm421 = vcmp.eq.f32.partialorder %v420, 8.507059e+37
      %v422 = vand.u32 %v409, 2147483648
      %v423 = vor.u32 1.1754944e-38, %v422
      %v424 = vsel %vm421, %v423, %v419
      %v425 = vmul.f32 %v410, %v424
      %v426 = vsel %vm408, %v425, 1e+30
      %v427 = vsel %vm164, %v426, inf
      %428 = vmin.xlane.f32.xlu0 %v427
      %v429 = vpop.xlane.xlu0 %428
      %vm430 = vcmp.lt.f32.partialorder %v407, 0.0
      %v431 = vsel %vm430, %v407, -1.0
      %v432 = vsub.f32 0.0, %v107
      %v433 = vrcp.pop %v431
      %v434 = vmul.f32 %v431, %v433
      %v435 = vsub.f32 1.0, %v434
      %v436 = vmul.f32 %v433, %v435
      %v437 = vadd.f32 %v433, %v436
      %vm438 = vweird.f32 %v431
      %vm439 = vweird.f32 %v433
      %vm440 = vmor %vm438, %vm439
      %v441 = vsel %vm440, %v433, %v437
      %v442 = vand.u32 2147483647, %v431
      %vm443 = vcmp.eq.f32.partialorder %v442, 8.507059e+37
      %v444 = vand.u32 %v431, 2147483648
      %v445 = vor.u32 1.1754944e-38, %v444
      %v446 = vsel %vm443, %v445, %v441
      %v447 = vmul.f32 %v432, %v446
      %v448 = vsel %vm430, %v447, 1e+30
      %v449 = vsel %vm164, %v448, inf
      %450 = vmin.xlane.f32.xlu0 %v449
      %v451 = vpop.xlane.xlu0 %450
      %v452 = vmin.f32 %v429, %v451
      %v453 = vmul.f32 %v452, 0.995
      %v454 = vmin.f32 %v453, 1.0
      %v455 = vmul.f32 %v454, %v275
      %v456 = vadd.f32 %v105, %v455
      %v457 = vmul.f32 %v454, %v403
      %v458 = vadd.f32 %v106, %v457
      %v459 = vmax.f32 %v458, 1e-12
      %v460 = vmul.f32 %v454, %v407
      %v461 = vadd.f32 %v107, %v460
      %v462 = vmax.f32 %v461, 1e-12
    $region38: #{_qp_forward.1} parent=1 // loop_footer
      %s104 = sadd.s32 1, %s100
    $region39: #{_qp_forward.1} parent=1 // loop_footer_branch
      %99 = sbr.rel target = $region35
    $region40: #{_qp_forward.1} parent=1 // loop_exit
      _
    %vm463 = vcmask 189440
    %464 = vst.msk [vmem:[#allocation2] sm:$0x3] %vm463, %v105
    // Predicated region
    $region48: #{_qp_forward.1} parent=1 // pred_check
      _
    $region49: #{_qp_forward.1} parent=1 // pred_check_branch
      %466 = sbr.rel (0) target = $region51
    $region50: #{_qp_forward.1} parent=1 // pred_region
      %468 = vsyncadd [#allocation3], 0
      %s470 = sshll.u32 [#allocation2], 4
      %s471 = int_to_ptr.vmem [resolvable:$true] %s470
      %s472 = sshll.u32 %s8, 4
      %s473 = int_to_ptr.hbm [resolvable:$true] %s472
      %475 = dma.vmem_to_hbm [thread:$0]  %s471, 32, %s473, [#allocation3]
    $region51: #{_qp_forward.1} parent=1 // pred_fallthru
      _
    // Predicated region
    $region52: #{_qp_forward.1} parent=1 // pred_check
      _
    $region53: #{_qp_forward.1} parent=1 // pred_check_branch
      %477 = sbr.rel (0) target = $region55
    $region54: #{_qp_forward.1} parent=1 // pred_region
      %479 = dma.done [#allocation3], 32
    $region55: #{_qp_forward.1} parent=1 // pred_fallthru
      _
    %480 = vsyncpa [#allocation3], 1

</llo_original>
